<compile_context>
chip_gen: v7x
topology: tpu7x:2x2x1
jax: 0.10.0
libtpu: 0.0.40
codegen_flags: <defaults>
</compile_context>

<pallas_src>
import functools

import jax
import jax.numpy as jnp
import numpy as np
from jax.experimental import pallas as pl
from jax.experimental.pallas import tpu as pltpu


def _shift2d_kernel(*args, H, W, c_blk, group, active):
    """One grid step: shift `c_blk` channels of one batch element.

    args (after the single scalar-prefetch operand):
      amt_ref    : (C,)       int32 SMEM  per-channel circular-roll amount
      pos_ref    : (2, HW)    int32 VMEM  row 0 = h index, row 1 = w index
      shifts_ref : (c_blk, 2) int32 VMEM  per-channel [sh, sw] integer shift
      wts_ref    : (c_blk, 4) f32   VMEM  bilinear blend weights (active only)
      x_ref      : (c_blk, HW)            input tile
      o_ref      : (c_blk, HW)            output tile (also used as staging)
    """
    if active:
        amt_ref, pos_ref, shifts_ref, wts_ref, x_ref, o_ref = args
    else:
        amt_ref, pos_ref, shifts_ref, x_ref, o_ref = args

    HW = H * W
    cg = pl.program_id(1)
    x_dt = x_ref.dtype
    # TODO(synk): a native bf16 dynamic lane roll may lower on newer Mosaic;
    # keep the conservative f32 upcast (lossless here: the roll is a pure
    # permutation, no arithmetic before the downcast).
    roll_dt = jnp.float32 if jnp.dtype(x_dt).itemsize < 4 else x_dt

    # ---- Stage 1: per-channel dynamic roll over the flattened H*W axis, ----
    # staged straight into o_ref.  Rows are processed in sublane-sized groups
    # so every vld/vst is a dense (group, HW) tile; the `group` rolls inside a
    # group are unrolled so the scheduler can interleave XLU rolls with VPU.
    num_groups = c_blk // group

    def roll_group(g, carry):
        base = pl.multiple_of(g * group, group)
        tile = x_ref[pl.ds(base, group), :]                 # dense (group, HW) load
        if roll_dt != x_dt:
            tile = tile.astype(roll_dt)
        rows = []
        for k in range(group):                              # unrolled
            amt = amt_ref[cg * c_blk + base + k]            # SMEM scalar
            rows.append(pltpu.roll(tile[k:k + 1, :], amt, axis=1))
        rolled = rows[0] if group == 1 else jnp.concatenate(rows, axis=0)
        o_ref[pl.ds(base, group), :] = rolled.astype(o_ref.dtype)   # dense store
        return carry

    jax.lax.fori_loop(0, num_groups, roll_group, 0, unroll=num_groups <= 8)

    # ---- Stage 2: block-wide boundary masks + (optional) bilinear blend. ----
    h_idx = pos_ref[pl.ds(0, 1), :]                         # (1, HW) int32
    w_idx = pos_ref[pl.ds(1, 1), :]                         # (1, HW) int32
    sv = shifts_ref[...]                                    # (c_blk, 2) int32
    sh = sv[:, 0:1]                                         # (c_blk, 1)
    sw = sv[:, 1:2]

    h_ok0 = (h_idx >= -sh) & (h_idx < H - sh)               # (c_blk, HW)
    w_ok0 = (w_idx >= -sw) & (w_idx < W - sw)

    blk = o_ref[...]                                        # staged rolled block
    if active:
        p00 = blk.astype(jnp.float32)
        zero = jnp.zeros_like(p00)
        h_ok1 = (h_idx >= -(sh + 1)) & (h_idx < H - (sh + 1))
        w_ok1 = (w_idx >= -(sw + 1)) & (w_idx < W - (sw + 1))
        wv = wts_ref[...]                                   # (c_blk, 4) f32
        # The three extra bilinear taps are STATIC whole-block rolls of p00
        # (roll(roll(x, a), b) == roll(x, a + b)): one dynamic roll per channel.
        out = wv[:, 0:1] * jnp.where(h_ok0 & w_ok0, p00, zero)
        out = out + wv[:, 1:2] * jnp.where(
            h_ok0 & w_ok1, pltpu.roll(p00, (HW - 1) % HW, axis=1), zero)
        out = out + wv[:, 2:3] * jnp.where(
            h_ok1 & w_ok0, pltpu.roll(p00, (HW - W) % HW, axis=1), zero)
        out = out + wv[:, 3:4] * jnp.where(
            h_ok1 & w_ok1, pltpu.roll(p00, (HW - W - 1) % HW, axis=1), zero)
        o_ref[...] = out.astype(o_ref.dtype)
    else:
        o_ref[...] = jnp.where(h_ok0 & w_ok0, blk, jnp.zeros_like(blk))


def _choose_c_block(B, C, HW, itemsize, budget_bytes=1 << 20):
    """Largest channel block that (a) divides C, (b) is a multiple of 8 or C
    itself (so every block shape satisfies the (8,128) rule), (c) keeps one
    block <= ~1 MiB so in/out double-buffers + temporaries stay well under the
    scoped-VMEM limits of v5e/v6e/v7x, and (d) leaves >= 2 grid blocks when
    possible so both v7x TensorCores get work."""
    bytes_per_row = HW * max(int(itemsize), 1)
    max_rows = max(int(budget_bytes // bytes_per_row), 1)
    cands = [d for d in range(8, C, 8) if C % d == 0] + [C]
    fits = [d for d in cands if d <= max_rows]
    # TODO(synk): if C has no multiple-of-8 divisor and a single channel blows
    # the budget, this falls back to a legal-but-large block (pad C externally).
    cb = max(fits) if fits else min(cands)
    if B * (C // cb) < 2:                 # v7x megacore: want >= 2 parallel blocks
        smaller = [d for d in cands if d < cb]
        if smaller:
            cb = max(smaller)
    return cb


def _choose_group(c_blk, itemsize):
    """Largest divisor of c_blk that is <= the native sublane tile
    (8 for 32-bit, 16 for bf16, 32 for int8/fp8) -> dense group loads/stores."""
    native = max(8, 32 // max(int(itemsize), 1))
    g = 1
    for d in range(1, min(c_blk, native) + 1):
        if c_blk % d == 0:
            g = d
    return g


def shift2d_forward(x, weight, *, padding="zeros", active_flag=False,
                    sparsity_term=5e-4):
    """Equivalent of _Shiftnd.forward (dim=2): returns (shifted_output, loss)."""
    # TODO(synk): only 'zeros' padding is implemented; border/periodic/reflect/
    # symmetric padding modes of torchshifts are not ported.
    assert padding == "zeros"
    B, C, H, W = x.shape
    assert weight.shape == (C, 2)
    HW = H * W

    w32 = weight.astype(jnp.float32)
    wh, ww = w32[:, 0], w32[:, 1]
    if active_flag:
        base_h, base_w = jnp.floor(wh), jnp.floor(ww)
        fh = (wh - base_h).astype(jnp.float32)
        fw = (ww - base_w).astype(jnp.float32)
        # Precomputed bilinear blend weights (one (C,4) f32 column block).
        wts = jnp.stack([(1.0 - fh) * (1.0 - fw), (1.0 - fh) * fw,
                         fh * (1.0 - fw), fh * fw], axis=1).astype(jnp.float32)
    else:
        # TODO(synk): jnp.round is round-half-to-even; torchshifts' C++ round is
        # half-away-from-zero — differs only for exactly-half-integer shifts.
        base_h, base_w = jnp.round(wh), jnp.round(ww)
        wts = None

    # Any |shift| >= H (or W) is fully out of range and masked to zero anyway;
    # clamping just keeps the integer roll arithmetic well-formed.
    sh_i = jnp.clip(base_h, -H, H).astype(jnp.int32)
    sw_i = jnp.clip(base_w, -W, W).astype(jnp.int32)
    amt = jnp.mod(-(sh_i * W + sw_i), HW).astype(jnp.int32)   # roll amount in [0, HW)
    shifts = jnp.stack([sh_i, sw_i], axis=1)                  # (C, 2) int32

    # (h, w) coordinates of every flattened position; constant index_map so it
    # is effectively fetched once.
    pos = jnp.stack([jnp.repeat(jnp.arange(H, dtype=jnp.int32), W),
                     jnp.tile(jnp.arange(W, dtype=jnp.int32), H)], axis=0)  # (2, HW)

    x2 = x.reshape(B, C, HW)                # free reshape, lane-dense last dim
    itemsize = x.dtype.itemsize
    c_blk = _choose_c_block(B, C, HW, itemsize)
    group = _choose_group(c_blk, itemsize)
    grid = (B, C // c_blk)

    kernel = functools.partial(_shift2d_kernel, H=H, W=W, c_blk=c_blk,
                               group=group, active=active_flag)

    in_specs = [
        pl.BlockSpec((2, HW), lambda b, cg, *_: (0, 0)),          # pos
        pl.BlockSpec((c_blk, 2), lambda b, cg, *_: (cg, 0)),      # shifts
    ]
    inputs = [pos, shifts]
    if active_flag:
        in_specs.append(pl.BlockSpec((c_blk, 4), lambda b, cg, *_: (cg, 0)))
        inputs.append(wts)
    in_specs.append(pl.BlockSpec((None, c_blk, HW), lambda b, cg, *_: (b, cg, 0)))
    inputs.append(x2)

    flops = (12 if active_flag else 1) * B * C * HW
    out = pl.pallas_call(
        kernel,
        out_shape=jax.ShapeDtypeStruct((B, C, HW), x.dtype),
        grid_spec=pltpu.PrefetchScalarGridSpec(
            num_scalar_prefetch=1,            # per-channel roll amounts (SMEM)
            grid=grid,
            in_specs=in_specs,
            out_specs=pl.BlockSpec((None, c_blk, HW), lambda b, cg, *_: (b, cg, 0)),
        ),
        compiler_params=pltpu.CompilerParams(
            dimension_semantics=("parallel", "parallel"),
            vmem_limit_bytes=32 << 20),
        # Memory-bound data-movement op: tell XLA the true byte traffic.
        cost_estimate=pl.CostEstimate(flops=flops, transcendentals=0,
                                      bytes_accessed=2 * B * C * HW * itemsize),
        # If profiling on v7x shows exposed DMA gaps, add
        # pipeline_mode=pl.Buffered(3) on the x/out BlockSpecs.
    )(amt, *inputs)

    out = out.reshape(B, C, H, W)

    loss = None
    if bool(sparsity_term):
        # Tiny (C, 2) reduction: plain JAX, no separate pallas_call.
        loss = jnp.asarray(sparsity_term, jnp.float32) * jnp.sum(jnp.abs(w32))

    # reduction_fn is identity (no emulate_dw), cut_borders is None.
    return out, loss


def _reference_shift(x, w):
    """Numpy reference for the non-active rounded shift ('zeros' padding)."""
    x = np.asarray(x)
    w = np.asarray(w)
    B, C, H, W = x.shape
    out = np.zeros_like(x)
    for c in range(C):
        sh = int(np.round(w[c, 0]))
        sw = int(np.round(w[c, 1]))
        for h in range(H):
            for ww_ in range(W):
                ih, iw = h + sh, ww_ + sw
                if 0 <= ih < H and 0 <= iw < W:
                    out[:, c, h, ww_] = x[:, c, ih, iw]
    return out


def _reference_shift_bilinear(x, w):
    """Numpy reference for the active (bilinear) shift ('zeros' padding)."""
    x = np.asarray(x)
    w = np.asarray(w)
    B, C, H, W = x.shape
    out = np.zeros((B, C, H, W), dtype=np.float64)
    for c in range(C):
        lh = int(np.floor(w[c, 0]))
        lw = int(np.floor(w[c, 1]))
        fh = float(w[c, 0]) - lh
        fw = float(w[c, 1]) - lw
        taps = [(lh, lw, (1 - fh) * (1 - fw)), (lh, lw + 1, (1 - fh) * fw),
                (lh + 1, lw, fh * (1 - fw)), (lh + 1, lw + 1, fh * fw)]
        for sh, sw, wt in taps:
            for h in range(H):
                for ww_ in range(W):
                    ih, iw = h + sh, ww_ + sw
                    if 0 <= ih < H and 0 <= iw < W:
                        out[:, c, h, ww_] += wt * x[:, c, ih, iw]
    return out.astype(x.dtype)


if __name__ == "__main__":
    key = jax.random.PRNGKey(0)
    kx, kw = jax.random.split(key)

    B, C, H, W = 2, 4, 16, 16
    x = jax.random.normal(kx, (B, C, H, W), dtype=jnp.float32)

    # Thumb rule 1 init: uniform(-init_shift, init_shift), init_shift = 1.
    init_shift = 1.0
    weight = jax.random.uniform(kw, (C, 2), dtype=jnp.float32,
                                minval=-init_shift, maxval=init_shift)

    # --- non-active (module default) path ---
    out, loss = shift2d_forward(x, weight, padding="zeros",
                                active_flag=False, sparsity_term=5e-4)
    out = jax.block_until_ready(out)
    loss = jax.block_until_ready(loss)

    ref_out = _reference_shift(x, weight)
    np.testing.assert_allclose(np.asarray(out), ref_out, rtol=1e-5, atol=1e-5)
    ref_loss = 5e-4 * np.sum(np.abs(np.asarray(weight)))
    np.testing.assert_allclose(np.asarray(loss), ref_loss, rtol=1e-5, atol=1e-6)
    assert out.shape == (B, C, H, W) and out.dtype == x.dtype

    # --- active (bilinear) path ---
    out_a, _ = shift2d_forward(x, weight, padding="zeros",
                               active_flag=True, sparsity_term=5e-4)
    out_a = jax.block_until_ready(out_a)
    ref_a = _reference_shift_bilinear(x, weight)
    np.testing.assert_allclose(np.asarray(out_a), ref_a, rtol=1e-4, atol=1e-5)

    print("KERNEL_OK")
</pallas_src>

<mosaic_0001>
module attributes {stable_mosaic.version = 11 : i64} {
  func.func @_shift2d_kernel(%arg0: i32, %arg1: i32, %arg2: memref<4xi32, #tpu.memory_space<smem>>, %arg3: memref<2x256xi32, #tpu.memory_space<vmem>>, %arg4: memref<4x2xi32, #tpu.memory_space<vmem>>, %arg5: memref<1x4x256xf32, #tpu.memory_space<vmem>>, %arg6: memref<1x4x256xf32, #tpu.memory_space<vmem>>) attributes {dimension_semantics = [#tpu.dimension_semantics<parallel>, #tpu.dimension_semantics<parallel>], iteration_bounds = array<i64: 2, 1>, scalar_prefetch = 1 : i64, scratch_operands = 0 : i64, tpu.core_type = #tpu.core_type<tc>, window_params = [{pipeline_mode = #tpu.pipeline_mode<synchronous>, transform_indices = @transform_0, window_bounds = array<i64: 2, 256>}, {transform_indices = @transform_1, window_bounds = array<i64: 4, 2>}, {transform_indices = @transform_2, window_bounds = array<i64: 1, 4, 256>}, {transform_indices = @transform_3, window_bounds = array<i64: 1, 4, 256>}]} {
    %c0_i32 = arith.constant 0 : i32
    %c4_i32 = arith.constant 4 : i32
    %0 = arith.muli %c0_i32, %c4_i32 : i32
    %1 = tpu.assume_multiple %0, 4 : i32
    %c0 = arith.constant 0 : index
    %2 = arith.index_cast %1 : i32 to index
    %c0_0 = arith.constant 0 : index
    %3 = vector.load %arg5[%c0, %2, %c0_0] : memref<1x4x256xf32, #tpu.memory_space<vmem>>, vector<1x4x256xf32>
    %4 = vector.shape_cast %3 : vector<1x4x256xf32> to vector<4x256xf32>
    %c4_i32_1 = arith.constant 4 : i32
    %5 = arith.muli %arg1, %c4_i32_1 : i32
    %6 = arith.addi %5, %1 : i32
    %c0_i32_2 = arith.constant 0 : i32
    %7 = arith.addi %6, %c0_i32_2 : i32
    %8 = arith.index_cast %7 : i32 to index
    %9 = memref.load %arg2[%8] : memref<4xi32, #tpu.memory_space<smem>>
    %10 = vector.extract_strided_slice %4 {offsets = [0, 0], sizes = [1, 256], strides = [1, 1]} : vector<4x256xf32> to vector<1x256xf32>
    %11 = tpu.dynamic_rotate %10 by %9 dim 1 : vector<1x256xf32>, i32 -> vector<1x256xf32>
    %c4_i32_3 = arith.constant 4 : i32
    %12 = arith.muli %arg1, %c4_i32_3 : i32
    %13 = arith.addi %12, %1 : i32
    %c1_i32 = arith.constant 1 : i32
    %14 = arith.addi %13, %c1_i32 : i32
    %15 = arith.index_cast %14 : i32 to index
    %16 = memref.load %arg2[%15] : memref<4xi32, #tpu.memory_space<smem>>
    %17 = vector.extract_strided_slice %4 {offsets = [1, 0], sizes = [1, 256], strides = [1, 1]} : vector<4x256xf32> to vector<1x256xf32>
    %18 = tpu.dynamic_rotate %17 by %16 dim 1 : vector<1x256xf32>, i32 -> vector<1x256xf32>
    %c4_i32_4 = arith.constant 4 : i32
    %19 = arith.muli %arg1, %c4_i32_4 : i32
    %20 = arith.addi %19, %1 : i32
    %c2_i32 = arith.constant 2 : i32
    %21 = arith.addi %20, %c2_i32 : i32
    %22 = arith.index_cast %21 : i32 to index
    %23 = memref.load %arg2[%22] : memref<4xi32, #tpu.memory_space<smem>>
    %24 = vector.extract_strided_slice %4 {offsets = [2, 0], sizes = [1, 256], strides = [1, 1]} : vector<4x256xf32> to vector<1x256xf32>
    %25 = tpu.dynamic_rotate %24 by %23 dim 1 : vector<1x256xf32>, i32 -> vector<1x256xf32>
    %c4_i32_5 = arith.constant 4 : i32
    %26 = arith.muli %arg1, %c4_i32_5 : i32
    %27 = arith.addi %26, %1 : i32
    %c3_i32 = arith.constant 3 : i32
    %28 = arith.addi %27, %c3_i32 : i32
    %29 = arith.index_cast %28 : i32 to index
    %30 = memref.load %arg2[%29] : memref<4xi32, #tpu.memory_space<smem>>
    %31 = vector.extract_strided_slice %4 {offsets = [3, 0], sizes = [1, 256], strides = [1, 1]} : vector<4x256xf32> to vector<1x256xf32>
    %32 = tpu.dynamic_rotate %31 by %30 dim 1 : vector<1x256xf32>, i32 -> vector<1x256xf32>
    %33 = tpu.concatenate %11, %18, %25, %32 in 0 : vector<1x256xf32>, vector<1x256xf32>, vector<1x256xf32>, vector<1x256xf32> -> vector<4x256xf32>
    %c0_6 = arith.constant 0 : index
    %34 = arith.index_cast %1 : i32 to index
    %c0_7 = arith.constant 0 : index
    %35 = vector.load %arg6[%c0_6, %34, %c0_7] : memref<1x4x256xf32, #tpu.memory_space<vmem>>, vector<1x4x256xf32>
    %36 = vector.shape_cast %35 : vector<1x4x256xf32> to vector<4x256xf32>
    %37 = vector.shape_cast %33 : vector<4x256xf32> to vector<1x4x256xf32>
    tpu.vector_store %arg6[%c0_6, %34, %c0_7], %37 {strides = array<i32>} : memref<1x4x256xf32, #tpu.memory_space<vmem>>, vector<1x4x256xf32>,
    %c1_i32_8 = arith.constant 1 : i32
    %c0_9 = arith.constant 0 : index
    %c0_10 = arith.constant 0 : index
    %38 = vector.load %arg3[%c0_9, %c0_10] : memref<2x256xi32, #tpu.memory_space<vmem>>, vector<1x256xi32>
    %c1 = arith.constant 1 : index
    %c0_11 = arith.constant 0 : index
    %39 = vector.load %arg3[%c1, %c0_11] : memref<2x256xi32, #tpu.memory_space<vmem>>, vector<1x256xi32>
    %c0_12 = arith.constant 0 : index
    %c0_13 = arith.constant 0 : index
    %40 = vector.load %arg4[%c0_12, %c0_13] : memref<4x2xi32, #tpu.memory_space<vmem>>, vector<4x2xi32>
    %41 = vector.extract_strided_slice %40 {offsets = [0, 0], sizes = [4, 1], strides = [1, 1]} : vector<4x2xi32> to vector<4x1xi32>
    %42 = vector.extract_strided_slice %40 {offsets = [0, 1], sizes = [4, 1], strides = [1, 1]} : vector<4x2xi32> to vector<4x1xi32>
    %c0_i32_14 = arith.constant 0 : i32
    %43 = vector.broadcast %c0_i32_14 : i32 to vector<4x1xi32>
    %44 = arith.subi %43, %41 : vector<4x1xi32>
    %45 = vector.broadcast %38 : vector<1x256xi32> to vector<4x256xi32>
    %46 = vector.broadcast %44 : vector<4x1xi32> to vector<4x256xi32>
    %47 = arith.cmpi sge, %45, %46 : vector<4x256xi32>
    %c16_i32 = arith.constant 16 : i32
    %48 = vector.broadcast %c16_i32 : i32 to vector<4x1xi32>
    %49 = arith.subi %48, %41 : vector<4x1xi32>
    %50 = vector.broadcast %38 : vector<1x256xi32> to vector<4x256xi32>
    %51 = vector.broadcast %49 : vector<4x1xi32> to vector<4x256xi32>
    %52 = arith.cmpi slt, %50, %51 : vector<4x256xi32>
    %53 = arith.andi %47, %52 : vector<4x256xi1>
    %c0_i32_15 = arith.constant 0 : i32
    %54 = vector.broadcast %c0_i32_15 : i32 to vector<4x1xi32>
    %55 = arith.subi %54, %42 : vector<4x1xi32>
    %56 = vector.broadcast %39 : vector<1x256xi32> to vector<4x256xi32>
    %57 = vector.broadcast %55 : vector<4x1xi32> to vector<4x256xi32>
    %58 = arith.cmpi sge, %56, %57 : vector<4x256xi32>
    %c16_i32_16 = arith.constant 16 : i32
    %59 = vector.broadcast %c16_i32_16 : i32 to vector<4x1xi32>
    %60 = arith.subi %59, %42 : vector<4x1xi32>
    %61 = vector.broadcast %39 : vector<1x256xi32> to vector<4x256xi32>
    %62 = vector.broadcast %60 : vector<4x1xi32> to vector<4x256xi32>
    %63 = arith.cmpi slt, %61, %62 : vector<4x256xi32>
    %64 = arith.andi %58, %63 : vector<4x256xi1>
    %c0_17 = arith.constant 0 : index
    %c0_18 = arith.constant 0 : index
    %c0_19 = arith.constant 0 : index
    %65 = vector.load %arg6[%c0_17, %c0_18, %c0_19] : memref<1x4x256xf32, #tpu.memory_space<vmem>>, vector<1x4x256xf32>
    %66 = vector.shape_cast %65 : vector<1x4x256xf32> to vector<4x256xf32>
    %67 = arith.andi %53, %64 : vector<4x256xi1>
    %cst = arith.constant 0.000000e+00 : f32
    %68 = vector.broadcast %cst : f32 to vector<4x256xf32>
    %69 = arith.select %67, %66, %68 : vector<4x256xi1>, vector<4x256xf32>
    %c0_20 = arith.constant 0 : index
    %c0_21 = arith.constant 0 : index
    %c0_22 = arith.constant 0 : index
    %70 = vector.load %arg6[%c0_20, %c0_21, %c0_22] : memref<1x4x256xf32, #tpu.memory_space<vmem>>, vector<1x4x256xf32>
    %71 = vector.shape_cast %70 : vector<1x4x256xf32> to vector<4x256xf32>
    %72 = vector.shape_cast %69 : vector<4x256xf32> to vector<1x4x256xf32>
    tpu.vector_store %arg6[%c0_20, %c0_21, %c0_22], %72 {strides = array<i32>} : memref<1x4x256xf32, #tpu.memory_space<vmem>>, vector<1x4x256xf32>,
    return
  }
  func.func @transform_0(%arg0: i32, %arg1: i32, %arg2: memref<4xi32, #tpu.memory_space<smem>>) -> (i32, i32) {
    %c0_i32 = arith.constant 0 : i32
    %c0_i32_0 = arith.constant 0 : i32
    %c0_i32_1 = arith.constant 0 : i32
    return %c0_i32, %c0_i32_0 : i32, i32
  }
  func.func @transform_1(%arg0: i32, %arg1: i32, %arg2: memref<4xi32, #tpu.memory_space<smem>>) -> (i32, i32) {
    %c0_i32 = arith.constant 0 : i32
    %c0_i32_0 = arith.constant 0 : i32
    return %arg1, %c0_i32 : i32, i32
  }
  func.func @transform_2(%arg0: i32, %arg1: i32, %arg2: memref<4xi32, #tpu.memory_space<smem>>) -> (i32, i32, i32) {
    %c0_i32 = arith.constant 0 : i32
    %c0_i32_0 = arith.constant 0 : i32
    return %arg0, %arg1, %c0_i32 : i32, i32, i32
  }
  func.func @transform_3(%arg0: i32, %arg1: i32, %arg2: memref<4xi32, #tpu.memory_space<smem>>) -> (i32, i32, i32) {
    %c0_i32 = arith.constant 0 : i32
    %c0_i32_0 = arith.constant 0 : i32
    return %arg0, %arg1, %c0_i32 : i32, i32, i32
  }
}

</mosaic_0001>

<llo_original>
// kernel: tpu_custom_call.1
$region0: #{tpu_custom_call.1}
  #allocation0 [shape = 'u32[]', space=smem, size = 0x4, offset = 0x4, fixed_abs, tag = 'smem constant byte address 0x4 - core index']
  #allocation1 [shape = 'u32[144,128]{1,0:T(1,128)}', space=vmem, size = 0x12000, scoped, tag = 'internal scratch']
  #allocation2 [shape = 's32[1]{0}', space=sflag, size = 0x4, scoped, tag = 'scoped memory for tpu_custom_call.1']
  #allocation3 [shape = 'u8[512]{0}', space=smem, size = 0x200, scoped, tag = 'prefetched SMEM operand 0']
  %s0 = inlined_call_operand.vmem [shape: s32[4], index: 0, kind: input, shape index: {}]
  %s1 = inlined_call_operand.hbm [shape: s32[2,256], index: 1, kind: input, shape index: {}]
  %s2 = inlined_call_operand.vmem [shape: s32[4,2], index: 2, kind: input, shape index: {}]
  %s3 = inlined_call_operand.vmem [shape: f32[2,4,256], index: 3, kind: input, shape index: {}]
  %s4 = inlined_call_operand.hbm [shape: f32[2,4,256], index: 4, kind: output, shape index: {}]
  %s5 = sld [smem:[#allocation0]]
  $region49: #{tpu_custom_call.1} parent=0
    _
  %s7 = ssub.s32 1, %s5
  %s8 = scalar_select 0, %s7, %s5
  %s9 = sshll.u32 %s0, 4
  %s10 = int_to_ptr.vmem [resolvable:$true] %s9
  %12 = dma.vmem_to_smem %s10, 16, [#allocation3], [#allocation2]
  %13 = dma.done [#allocation2], 16
  %14 = sfence
  $region1: #{tpu_custom_call.1} parent=0
    #allocation4 [shape = 'u8[2048]{0}', space=vmem, size = 0x800, scoped, tag = 'input window, operand 1, single buffered']
    #allocation5 [shape = 's32[2]{0}', space=sflag, size = 0x8, scoped, tag = 'scoped memory for tpu_custom_call.1']
    #allocation6 [shape = 's32[2]{0}', space=sflag, size = 0x8, scoped, tag = 'scoped memory for tpu_custom_call.1']
    #allocation7 [shape = 'u8[8192]{0}', space=vmem, size = 0x2000, scoped, tag = 'output window, operand 0']
    %15 = vsyncpa [#allocation5], 0
    %16 = vsyncpa [#allocation6], 0
    %s17 = scalar_lea.sflag [#allocation6], 1
    %18 = vsyncpa %s17, 0
    loop: start=0, step=1, limit=4
    $region2: #{tpu_custom_call.1} parent=1 // loop_pre_header
      _
    $region3: #{tpu_custom_call.1} parent=1 // loop_header
      %s20 = sphi 0, %s24
      %p21 = scmp.ge.s32.totalorder %s20, 4
      %s27 = sphi 0, %s39
      %s28 = sphi 0, %s35
      %s29 = sphi 0, %s27
      %s30 = sphi 0, %s28
      %s31 = sphi 0, %s29
      %s32 = sphi 0, %s30
      %s40 = sphi 0, %s40
      %s42 = sphi 0, %s40
      %s43 = sphi 0, %s42
      %s57 = sphi 0, %s43
      %s63 = sphi 0, %s65
      %s66 = sphi 0, %s63
      %s67 = sphi 0, %s66
      %s83 = sphi 0, %s67
      %s91 = sphi 0, %s93
      %s94 = sphi 0, %s91
      %s95 = sphi 0, %s94
      %s111 = sphi 0, %s95
      %s119 = sphi 0, %s121
      %s122 = sphi 0, %s119
      %s123 = sphi 0, %s122
      %s139 = sphi 0, %s123
    $region4: #{tpu_custom_call.1} parent=1 // loop_header_branch
      %23 = sbr.rel (%p21) target = $region8
    $region5: #{tpu_custom_call.1} parent=1 // loop_body
      %s25 = ssub.s32 %s20, 1
      %s26 = ssub.s32 %s20, 2
      %s33 = sadd.s32 1, %s28
      %p34 = scmp.ge.s32.totalorder %s33, 1
      %s35 = scalar_select %p34, 0, %s33
      %s36 = sadd.s32 1, %s27
      %s37 = scalar_select %p34, %s36, %s27
      %p38 = scmp.ge.s32.totalorder %s37, 2
      %s39 = scalar_select %p38, 0, %s37
      %s41 = sadd.s32 %s40, 1
      %p44 = scmp.eq.s32.totalorder %s20, 1
      %p45 = scmp.ne.s32.totalorder %s40, %s42
      %p46 = scmp.eq.s32.totalorder %s20, 0
      %p47 = por %p45, %p46
      %p48 = scmp.ne.s32.totalorder %s40, %s42
      %p49 = scmp.eq.s32.totalorder %s25, 1
      %p50 = por %p48, %p49
      %p51 = scmp.ne.s32.totalorder %s42, %s43
      %p52 = scmp.eq.s32.totalorder %s25, 0
      %p53 = por %p51, %p52
      %p54 = scmp.ne.s32.totalorder %s42, %s43
      %p55 = scmp.eq.s32.totalorder %s26, 1
      %p56 = por %p54, %p55
      %p58 = scmp.ne.s32.totalorder %s43, %s57
      %p59 = scmp.eq.s32.totalorder %s26, 0
      %p60 = por %p58, %p59
      %s61 = ssub.s32 %s28, %s35
      %p62 = scmp.eq.s32.totalorder %s61, 0
      %s64 = sadd.s32 %s63, 1
      %s65 = scalar_select %p62, %s63, %s64
      %p68 = pneg %p62
      %p69 = scmp.eq.s32.totalorder %s20, 1
      %p70 = por %p68, %p69
      %p71 = scmp.ne.s32.totalorder %s63, %s66
      %p72 = scmp.eq.s32.totalorder %s20, 0
      %p73 = por %p71, %p72
      %p74 = scmp.ne.s32.totalorder %s63, %s66
      %p75 = scmp.eq.s32.totalorder %s25, 1
      %p76 = por %p74, %p75
      %p77 = scmp.ne.s32.totalorder %s66, %s67
      %p78 = scmp.eq.s32.totalorder %s25, 0
      %p79 = por %p77, %p78
      %p80 = scmp.ne.s32.totalorder %s66, %s67
      %p81 = scmp.eq.s32.totalorder %s26, 1
      %p82 = por %p80, %p81
      %p84 = scmp.ne.s32.totalorder %s67, %s83
      %p85 = scmp.eq.s32.totalorder %s26, 0
      %p86 = por %p84, %p85
      %s87 = ssub.s32 %s27, %s39
      %s88 = ssub.s32 %s28, %s35
      %s89 = sor.u32 %s87, %s88
      %p90 = scmp.eq.s32.totalorder %s89, 0
      %s92 = sadd.s32 %s91, 1
      %s93 = scalar_select %p90, %s91, %s92
      %p96 = pneg %p90
      %p97 = scmp.eq.s32.totalorder %s20, 1
      %p98 = por %p96, %p97
      %p99 = scmp.ne.s32.totalorder %s91, %s94
      %p100 = scmp.eq.s32.totalorder %s20, 0
      %p101 = por %p99, %p100
      %p102 = scmp.ne.s32.totalorder %s91, %s94
      %p103 = scmp.eq.s32.totalorder %s25, 1
      %p104 = por %p102, %p103
      %p105 = scmp.ne.s32.totalorder %s94, %s95
      %p106 = scmp.eq.s32.totalorder %s25, 0
      %p107 = por %p105, %p106
      %p108 = scmp.ne.s32.totalorder %s94, %s95
      %p109 = scmp.eq.s32.totalorder %s26, 1
      %p110 = por %p108, %p109
      %p112 = scmp.ne.s32.totalorder %s95, %s111
      %p113 = scmp.eq.s32.totalorder %s26, 0
      %p114 = por %p112, %p113
      %s115 = ssub.s32 %s27, %s39
      %s116 = ssub.s32 %s28, %s35
      %s117 = sor.u32 %s115, %s116
      %p118 = scmp.eq.s32.totalorder %s117, 0
      %s120 = sadd.s32 %s119, 1
      %s121 = scalar_select %p118, %s119, %s120
      %p124 = pneg %p118
      %p125 = scmp.eq.s32.totalorder %s20, 1
      %p126 = por %p124, %p125
      %p127 = scmp.ne.s32.totalorder %s119, %s122
      %p128 = scmp.eq.s32.totalorder %s20, 0
      %p129 = por %p127, %p128
      %p130 = scmp.ne.s32.totalorder %s119, %s122
      %p131 = scmp.eq.s32.totalorder %s25, 1
      %p132 = por %p130, %p131
      %p133 = scmp.ne.s32.totalorder %s122, %s123
      %p134 = scmp.eq.s32.totalorder %s25, 0
      %p135 = por %p133, %p134
      %p136 = scmp.ne.s32.totalorder %s122, %s123
      %p137 = scmp.eq.s32.totalorder %s26, 1
      %p138 = por %p136, %p137
      %p140 = scmp.ne.s32.totalorder %s123, %s139
      %p141 = scmp.eq.s32.totalorder %s26, 0
      %p142 = por %p140, %p141
      %p143 = scmp.le.s32.totalorder 1, %s20
      %p144 = scmp.lt.s32.totalorder %s20, 3
      %p145 = pnand %p143, %p144
      %p146 = pneg %p145
      // Predicated region
      $region9: #{tpu_custom_call.1} parent=5 // pred_check
        _
      $region10: #{tpu_custom_call.1} parent=5 // pred_check_branch
        %148 = sbr.rel (%p145) target = $region12
      $region11: #{tpu_custom_call.1} parent=5 // pred_region
        %s149 = ssub.s32 %s20, 1
        // Predicated region
        $region13: #{tpu_custom_call.1} parent=11 // pred_check
          %p150 = pneg %p53
        $region14: #{tpu_custom_call.1} parent=11 // pred_check_branch
          %152 = sbr.rel (%p150) target = $region16
        $region15: #{tpu_custom_call.1} parent=11 // pred_region
          %s154 = ssub.s32 64, 64
          %155 = vsyncadd [#allocation5], %s154
          %s157 = sshll.u32 [#allocation4], 4
          %s158 = int_to_ptr.vmem [resolvable:$true] %s157
          %160 = dma.hbm_to_vmem [thread:$0]  %s1, 64, %s158, [#allocation5]
        $region16: #{tpu_custom_call.1} parent=11 // pred_fallthru
          _
        // Predicated region
        $region17: #{tpu_custom_call.1} parent=11 // pred_check
          %p161 = pneg %p79
        $region18: #{tpu_custom_call.1} parent=11 // pred_check_branch
          %163 = sbr.rel (%p161) target = $region20
        $region19: #{tpu_custom_call.1} parent=11 // pred_region
          %p164 = scmp.lt.s32.totalorder %s30, 0
          %s165 = scalar_select %p164, %s30, 0
          %s166 = smul.addr %s165, 4
          %s167 = scalar_lea.vmem %s2, %s166
        $region20: #{tpu_custom_call.1} parent=11 // pred_fallthru
          _
      $region12: #{tpu_custom_call.1} parent=5 // pred_fallthru
        _
      %p168 = scmp.lt.s32.totalorder %s20, 2
      // Predicated region
      $region21: #{tpu_custom_call.1} parent=5 // pred_check
        %p169 = pneg %p168
      $region22: #{tpu_custom_call.1} parent=5 // pred_check_branch
        %171 = sbr.rel (%p169) target = $region24
      $region23: #{tpu_custom_call.1} parent=5 // pred_region
        // Predicated region
        $region25: #{tpu_custom_call.1} parent=23 // pred_check
          %p172 = pneg %p101
        $region26: #{tpu_custom_call.1} parent=23 // pred_check_branch
          %174 = sbr.rel (%p172) target = $region28
        $region27: #{tpu_custom_call.1} parent=23 // pred_region
          %p175 = scmp.lt.s32.totalorder %s27, 1
          %s176 = scalar_select %p175, %s27, 1
          %p177 = scmp.lt.s32.totalorder %s28, 0
          %s178 = scalar_select %p177, %s28, 0
          %s179 = smul.addr %s178, 2
          %s180 = smul.addr %s176, 2
          %s181 = sadd.s32 %s179, %s180
          %s182 = smul.addr %s181, 4
          %s183 = scalar_lea.vmem %s3, %s182
        $region28: #{tpu_custom_call.1} parent=23 // pred_fallthru
          _
      $region24: #{tpu_custom_call.1} parent=5 // pred_fallthru
        _
      %p184 = scmp.le.s32.totalorder 1, %s20
      %p185 = scmp.lt.s32.totalorder %s20, 3
      %p186 = pnand %p184, %p185
      %p187 = pneg %p186
      // Predicated region
      $region29: #{tpu_custom_call.1} parent=5 // pred_check
        _
      $region30: #{tpu_custom_call.1} parent=5 // pred_check_branch
        %189 = sbr.rel (%p186) target = $region32
      $region31: #{tpu_custom_call.1} parent=5 // pred_region
        %s190 = ssub.s32 %s20, 1
        // Predicated region
        $region33: #{tpu_custom_call.1} parent=31 // pred_check
          %p191 = pneg %p53
        $region34: #{tpu_custom_call.1} parent=31 // pred_check_branch
          %193 = sbr.rel (%p191) target = $region36
        $region35: #{tpu_custom_call.1} parent=31 // pred_region
          %194 = dma.done [#allocation5], 64
        $region36: #{tpu_custom_call.1} parent=31 // pred_fallthru
          _
        %p195 = pneg %p53
        %p196 = pneg %p50
        %p197 = scmp.lt.s32.totalorder %s30, 0
        %s198 = scalar_select %p197, %s30, 0
        %s199 = smul.addr %s198, 4
        %s200 = scalar_lea.vmem %s2, %s199
        %p201 = pneg %p79
        %p202 = pneg %p76
        %p203 = scmp.lt.s32.totalorder %s29, 1
        %s204 = scalar_select %p203, %s29, 1
        %p205 = scmp.lt.s32.totalorder %s30, 0
        %s206 = scalar_select %p205, %s30, 0
        %s207 = smul.addr %s206, 2
        %s208 = smul.addr %s204, 2
        %s209 = sadd.s32 %s207, %s208
        %s210 = smul.addr %s209, 4
        %s211 = scalar_lea.vmem %s3, %s210
        %p212 = pneg %p107
        %p213 = pneg %p104
        %p214 = pneg %p135
        %p215 = pneg %p132
        %s216 = sand.u32 %s122, 1
        %s217 = scalar_lea.sflag [#allocation6], %s216
        %s218 = sand.u32 %s122, 1
        %s219 = smul.addr %s218, 8
        %s220 = scalar_lea.vmem [#allocation7], %s219
        %p221 = scmp.lt.s32.totalorder %s30, 0
        %s222 = scalar_select %p221, %s30, 0
        %s223 = smul.addr %s222, 4
        %s224 = scalar_lea.vmem %s2, %s223
        %p225 = scmp.lt.s32.totalorder %s29, 1
        %s226 = scalar_select %p225, %s29, 1
        %p227 = scmp.lt.s32.totalorder %s30, 0
        %s228 = scalar_select %p227, %s30, 0
        %s229 = smul.addr %s228, 2
        %s230 = smul.addr %s226, 2
        %s231 = sadd.s32 %s229, %s230
        %s232 = smul.addr %s231, 4
        %s233 = scalar_lea.vmem %s3, %s232
        %s234 = smul.u32 0, 2
        %s235 = smul.addr %s234, 4
        %s236 = scalar_lea.vmem %s233, %s235
        %v237 = vld [vmem:[%s236] sm:$0xff]
        %s238 = smul.u32 %s30, 4
        %s239 = sadd.s32 %s238, 0
        %s240 = sld [smem:[#allocation3 + %s239]]
        %v242 = vlaneseq
        %v243 = vshrl.u32 %v242, 7
        %v244 = vsub.s32 0, %v243
        %v245 = vrot.slane %v237, %v244
        %v246 = vlaneseq
        %v247 = vshrl.u32 %v246, 7
        %v248 = vsub.s32 4, %v247
        %v249 = vrot.slane %v237, %v248
        %s252 = sand.u32 %s240, 255
        %s253 = sand.u32 %s252, 127
        %s254 = sshrl.u32 %s252, 7
        %255 = vrot.lane.b32.xlu0 %v245, %s253
        %v256 = vpop.permute.xlu0 %255
        %257 = vrot.lane.b32.xlu0 %v249, %s253
        %v258 = vpop.permute.xlu0 %257
        %v259 = vstv %s253
        %v260 = vlaneseq
        %v261 = vand.u32 %v260, 127
        %vm262 = vcmp.lt.s32.totalorder %v261, %v259
        %v263 = vsel %vm262, %v256, %v258
        %v264 = vsel %vm262, %v258, %v256
        %s265 = sand.u32 %s254, 1
        %v266 = vstv %s265
        %vm267 = vcmp.ne.s32.totalorder %v266, 0
        %v268 = vsel %vm267, %v263, %v264
        %v269 = vsel %vm267, %v264, %v263
        %s270 = sadd.s32 %s239, 1
        %s271 = sld [smem:[#allocation3 + %s270]]
        %v272 = vlaneseq
        %v273 = vshrl.u32 %v272, 7
        %v274 = vsub.s32 1, %v273
        %v275 = vrot.slane %v237, %v274
        %v276 = vlaneseq
        %v277 = vshrl.u32 %v276, 7
        %v278 = vsub.s32 5, %v277
        %v279 = vrot.slane %v237, %v278
        %s282 = sand.u32 %s271, 255
        %s283 = sand.u32 %s282, 127
        %s284 = sshrl.u32 %s282, 7
        %285 = vrot.lane.b32.xlu0 %v275, %s283
        %v286 = vpop.permute.xlu0 %285
        %287 = vrot.lane.b32.xlu0 %v279, %s283
        %v288 = vpop.permute.xlu0 %287
        %v289 = vstv %s283
        %vm290 = vcmp.lt.s32.totalorder %v261, %v289
        %v291 = vsel %vm290, %v286, %v288
        %v292 = vsel %vm290, %v288, %v286
        %s293 = sand.u32 %s284, 1
        %v294 = vstv %s293
        %vm295 = vcmp.ne.s32.totalorder %v294, 0
        %v296 = vsel %vm295, %v291, %v292
        %v297 = vsel %vm295, %v292, %v291
        %s298 = sadd.s32 %s239, 2
        %s299 = sld [smem:[#allocation3 + %s298]]
        %v300 = vlaneseq
        %v301 = vshrl.u32 %v300, 7
        %v302 = vsub.s32 2, %v301
        %v303 = vrot.slane %v237, %v302
        %v304 = vlaneseq
        %v305 = vshrl.u32 %v304, 7
        %v306 = vsub.s32 6, %v305
        %v307 = vrot.slane %v237, %v306
        %s310 = sand.u32 %s299, 255
        %s311 = sand.u32 %s310, 127
        %s312 = sshrl.u32 %s310, 7
        %313 = vrot.lane.b32.xlu0 %v303, %s311
        %v314 = vpop.permute.xlu0 %313
        %315 = vrot.lane.b32.xlu0 %v307, %s311
        %v316 = vpop.permute.xlu0 %315
        %v317 = vstv %s311
        %vm318 = vcmp.lt.s32.totalorder %v261, %v317
        %v319 = vsel %vm318, %v314, %v316
        %v320 = vsel %vm318, %v316, %v314
        %s321 = sand.u32 %s312, 1
        %v322 = vstv %s321
        %vm323 = vcmp.ne.s32.totalorder %v322, 0
        %v324 = vsel %vm323, %v319, %v320
        %v325 = vsel %vm323, %v320, %v319
        %s326 = sadd.s32 %s239, 3
        %s327 = sld [smem:[#allocation3 + %s326]]
        %v328 = vlaneseq
        %v329 = vshrl.u32 %v328, 7
        %v330 = vsub.s32 3, %v329
        %v331 = vrot.slane %v237, %v330
        %v332 = vlaneseq
        %v333 = vshrl.u32 %v332, 7
        %v334 = vsub.s32 7, %v333
        %v335 = vrot.slane %v237, %v334
        %s338 = sand.u32 %s327, 255
        %s339 = sand.u32 %s338, 127
        %s340 = sshrl.u32 %s338, 7
        %341 = vrot.lane.b32.xlu0 %v331, %s339
        %v342 = vpop.permute.xlu0 %341
        %343 = vrot.lane.b32.xlu0 %v335, %s339
        %v344 = vpop.permute.xlu0 %343
        %v345 = vstv %s339
        %vm346 = vcmp.lt.s32.totalorder %v261, %v345
        %v347 = vsel %vm346, %v342, %v344
        %v348 = vsel %vm346, %v344, %v342
        %s349 = sand.u32 %s340, 1
        %v350 = vstv %s349
        %vm351 = vcmp.ne.s32.totalorder %v350, 0
        %v352 = vsel %vm351, %v347, %v348
        %v353 = vsel %vm351, %v348, %v347
        %v356 = vrot.slane %v296, 7
        %v357 = vrot.slane %v297, 7
        %v362 = vrot.slane %v324, 6
        %v363 = vrot.slane %v325, 6
        %v368 = vrot.slane %v352, 5
        %v369 = vrot.slane %v353, 5
        %vm372 = vcmask 1040384
        %v373 = vsel %vm372, %v268, %v356
        %v374 = vsel %vm372, %v269, %v357
        %vm375 = vcmask 1041408
        %v376 = vsel %vm375, %v373, %v362
        %v377 = vsel %vm375, %v374, %v363
        %vm378 = vcmask 1042432
        %v379 = vsel %vm378, %v376, %v368
        %v380 = vsel %vm378, %v377, %v369
        %v383 = vcombine.low %v379, %v380
        %s385 = smul.addr %s234, 4
        %s386 = scalar_lea.vmem %s220, %s385 [#allocation7]
        %387 = vst [vmem:[%s386] sm:$0xff] %v383
        %v388 = vld [vmem:[#allocation4] ss:$2 sm:$0x3]
        %s389 = scalar_lea.vmem [#allocation4], 1
        %v390 = vld [vmem:[%s389] ss:$2 sm:$0x3]
        %v391 = vld [vmem:[%s224] sm:$0xf]
        %v392 = vsub.s32 0, %v391
        %v393 = vlaneseq
        %v394 = vshrl.u32 %v393, 7
        %v395 = vsub.s32 0, %v394
        %v396 = vrot.slane %v388, %v395
        %v397 = vlaneseq
        %v398 = vshrl.u32 %v397, 7
        %v399 = vsub.s32 1, %v398
        %v400 = vrot.slane %v388, %v399
        %401 = vset.pattern.permute.xlu0 0
        %402 = vperm.xlu0 %401, %v392
        %v403 = vpop.permute.xlu0 %402
        %vm404 = vcmp.ge.s32.totalorder %v396, %v403
        %vm405 = vcmp.ge.s32.totalorder %v400, %v403
        %v406 = vsub.s32 16, %v391
        %407 = vset.pattern.permute.xlu0 0
        %408 = vperm.xlu0 %407, %v406
        %v409 = vpop.permute.xlu0 %408
        %vm410 = vcmp.lt.s32.totalorder %v396, %v409
        %vm411 = vcmp.lt.s32.totalorder %v400, %v409
        %vm412 = vmand %vm404, %vm410
        %vm413 = vmand %vm405, %vm411
        %v414 = vlaneseq
        %v415 = vshrl.u32 %v414, 7
        %v416 = vsub.s32 0, %v415
        %v417 = vrot.slane %v390, %v416
        %v418 = vlaneseq
        %v419 = vshrl.u32 %v418, 7
        %v420 = vsub.s32 1, %v419
        %v421 = vrot.slane %v390, %v420
        %422 = vset.pattern.permute.xlu0 1
        %423 = vperm.xlu0 %422, %v392
        %v424 = vpop.permute.xlu0 %423
        %vm425 = vcmp.ge.s32.totalorder %v417, %v424
        %vm426 = vcmp.ge.s32.totalorder %v421, %v424
        %427 = vset.pattern.permute.xlu0 1
        %428 = vperm.xlu0 %427, %v406
        %v429 = vpop.permute.xlu0 %428
        %vm430 = vcmp.lt.s32.totalorder %v417, %v429
        %vm431 = vcmp.lt.s32.totalorder %v421, %v429
        %vm432 = vmand %vm425, %vm430
        %vm433 = vmand %vm426, %vm431
        %v434 = vld [vmem:[%s220] sm:$0xff]
        %vm435 = vmand %vm412, %vm432
        %vm436 = vmand %vm413, %vm433
        %v438 = vcombine.high %v434, %v434
        %v440 = vsel %vm435, %v434, 0.0
        %v441 = vsel %vm436, %v438, 0.0
        %v444 = vcombine.low %v440, %v441
        %446 = vst [vmem:[%s220] sm:$0xff] %v444
        %s447 = sand.u32 %s122, 1
        %s448 = scalar_lea.sflag [#allocation6], %s447
        %s449 = sand.u32 %s122, 1
        %s450 = smul.addr %s449, 8
        %s451 = scalar_lea.vmem [#allocation7], %s450
        // Predicated region
        $region37: #{tpu_custom_call.1} parent=31 // pred_check
          %p452 = pneg %p132
        $region38: #{tpu_custom_call.1} parent=31 // pred_check_branch
          %454 = sbr.rel (%p452) target = $region40
        $region39: #{tpu_custom_call.1} parent=31 // pred_region
          %s456 = ssub.s32 128, 128
          %457 = vsyncadd %s448, %s456
          %s458 = smul.addr %s30, 2
          %s459 = smul.addr %s29, 2
          %s460 = sadd.s32 %s458, %s459
          %s461 = smul.addr %s460, 64
          %s462 = scalar_lea.hbm %s4, %s461
          %s464 = sshll.u32 %s451, 4
          %s465 = int_to_ptr.vmem [resolvable:$true] %s464
          %467 = dma.vmem_to_hbm [thread:$0]  %s465, 128, %s462, %s448
        $region40: #{tpu_custom_call.1} parent=31 // pred_fallthru
          _
      $region32: #{tpu_custom_call.1} parent=5 // pred_fallthru
        _
      %p468 = scmp.le.s32.totalorder 2, %s20
      // Predicated region
      $region41: #{tpu_custom_call.1} parent=5 // pred_check
        %p469 = pneg %p468
      $region42: #{tpu_custom_call.1} parent=5 // pred_check_branch
        %471 = sbr.rel (%p469) target = $region44
      $region43: #{tpu_custom_call.1} parent=5 // pred_region
        %s472 = ssub.s32 %s20, 2
        // Predicated region
        $region45: #{tpu_custom_call.1} parent=43 // pred_check
          %p473 = pneg %p138
        $region46: #{tpu_custom_call.1} parent=43 // pred_check_branch
          %475 = sbr.rel (%p473) target = $region48
        $region47: #{tpu_custom_call.1} parent=43 // pred_region
          %s476 = sand.u32 %s123, 1
          %s477 = scalar_lea.sflag [#allocation6], %s476
          %s478 = sand.u32 %s123, 1
          %s479 = smul.addr %s478, 8
          %s480 = scalar_lea.vmem [#allocation7], %s479
          %481 = dma.done %s477, 128
        $region48: #{tpu_custom_call.1} parent=43 // pred_fallthru
          _
      $region44: #{tpu_custom_call.1} parent=5 // pred_fallthru
        _
    $region6: #{tpu_custom_call.1} parent=1 // loop_footer
      %s24 = sadd.s32 1, %s20
    $region7: #{tpu_custom_call.1} parent=1 // loop_footer_branch
      %19 = sbr.rel target = $region3
    $region8: #{tpu_custom_call.1} parent=1 // loop_exit
      _
    %482 = vsyncpa [#allocation5], 1
    %s483 = scalar_lea.sflag [#allocation5], 1
    %484 = vsyncpa %s483, 1
    %485 = vsyncpa [#allocation6], 1
    %s486 = scalar_lea.sflag [#allocation6], 1
    %487 = vsyncpa %s486, 1

</llo_original>
